<compile_context>
chip_gen: v5e
topology: v5e:2x2
jax: 0.10.0
libtpu: 0.0.40
codegen_flags: <defaults>
</compile_context>

<pallas_src>
import jax
import jax.numpy as jnp
from jax.experimental import pallas as pl
from jax.experimental.pallas import tpu as pltpu

DEC_OUT = 4096        # IndividualDecoder(in_features, 4096)
DEC_HIDDEN = 4        # Linear(in_, 4)
LEAKY_SLOPE = 0.1


def _fc_kernel(x_ref, wfc_ref, bfc_ref, out_ref):
    """Classification head only (on=False path): out = x @ Wfc + bfc."""
    x = x_ref[...].astype(jnp.float32)
    out = jnp.dot(x, wfc_ref[...].astype(jnp.float32),
                  preferred_element_type=jnp.float32)
    out_ref[...] = (out + bfc_ref[...].astype(jnp.float32)).astype(out_ref.dtype)


def _dual_head_kernel(x_ref, wfc_ref, bfc_ref,
                      w1_ref, b1_ref, w2_ref, b2_ref,
                      logits_ref, dec_ref):
    """Fused fc head + IndividualDecoder for one (batch tile, decoder tile)."""
    x = x_ref[...].astype(jnp.float32)                        # (TB, F)

    # fc head: compute once per batch tile; its output block index is constant
    # along the j axis, so it stays resident until the batch tile changes.
    @pl.when(pl.program_id(1) == 0)
    def _():
        logits = jnp.dot(x, wfc_ref[...].astype(jnp.float32),
                         preferred_element_type=jnp.float32)
        logits_ref[...] = (logits + bfc_ref[...].astype(jnp.float32)
                           ).astype(logits_ref.dtype)

    # IndividualDecoder, restructured: 4096 x [Linear(F,4), LeakyReLU(0.1),
    # Linear(4,1)] == 4 wide (F, TJ) matmuls over a lane-dense tile.
    acc = jnp.zeros(dec_ref.shape, jnp.float32)               # (TB, TJ)
    for k in range(DEC_HIDDEN):                               # static unroll (4)
        h = jnp.dot(x, w1_ref[k].astype(jnp.float32),
                    preferred_element_type=jnp.float32)
        h = h + b1_ref[k:k + 1, :].astype(jnp.float32)
        h = jnp.where(h >= 0.0, h, LEAKY_SLOPE * h)           # LeakyReLU(0.1)
        acc = acc + h * w2_ref[k:k + 1, :].astype(jnp.float32)
    dec_ref[...] = (acc + b2_ref[...].astype(jnp.float32)).astype(dec_ref.dtype)


class DualModel3Pallas:
    """Pallas re-implementation of DualModel3.forward (fc head + decoder)."""

    def __init__(self, backbone_apply, in_features, num_classes, key,
                 batch_tile=8, dec_tile=512, dtype=jnp.float32):
        # TODO(synk): the backbone `model` (timm resnet/vit/mixer) is injected
        # into DualModel3 from outside; it runs as a plain JAX callable here.
        self.backbone = backbone_apply
        self.in_features = in_features
        self.num_classes = num_classes
        self.batch_tile = batch_tile
        self.dec_tile = dec_tile
        self.dtype = dtype
        assert DEC_OUT % dec_tile == 0

        kfc, kfb, k1w, k1b, k2w, k2b = jax.random.split(key, 6)
        f = in_features
        # fc head (replacement for model.fc / model.head)
        self.wfc = (jax.random.normal(kfc, (f, num_classes), jnp.float32)
                    / jnp.sqrt(f)).astype(dtype)
        self.bfc = (jax.random.normal(kfb, (1, num_classes), jnp.float32)
                    / jnp.sqrt(f)).astype(dtype)
        # IndividualDecoder params, stacked over the 4096 heads:
        #   w1[k, :, j] = fcs[j][0].weight[k, :]   b1[k, j] = fcs[j][0].bias[k]
        #   w2[k, j]    = fcs[j][2].weight[0, k]   b2[0, j] = fcs[j][2].bias[0]
        self.w1 = (jax.random.normal(k1w, (DEC_HIDDEN, f, DEC_OUT), jnp.float32)
                   / jnp.sqrt(f)).astype(dtype)
        self.b1 = (jax.random.normal(k1b, (DEC_HIDDEN, DEC_OUT), jnp.float32)
                   / jnp.sqrt(f)).astype(dtype)
        self.w2 = (jax.random.normal(k2w, (DEC_HIDDEN, DEC_OUT), jnp.float32)
                   / jnp.sqrt(DEC_HIDDEN)).astype(dtype)
        self.b2 = (jax.random.normal(k2b, (1, DEC_OUT), jnp.float32)
                   / jnp.sqrt(DEC_HIDDEN)).astype(dtype)

    # ---------------- on=False path: logits only ----------------
    def _fc(self, feats):
        b, f = feats.shape
        c = self.num_classes
        tb = self.batch_tile if b % self.batch_tile == 0 else b
        return pl.pallas_call(
            _fc_kernel,
            out_shape=jax.ShapeDtypeStruct((b, c), self.dtype),
            grid=(b // tb,),
            in_specs=[pl.BlockSpec((tb, f), lambda i: (i, 0)),
                      pl.BlockSpec((f, c), lambda i: (0, 0)),
                      pl.BlockSpec((1, c), lambda i: (0, 0))],
            out_specs=pl.BlockSpec((tb, c), lambda i: (i, 0)),
            compiler_params=pltpu.CompilerParams(
                dimension_semantics=("parallel",)),
        )(feats, self.wfc, self.bfc)

    # ---------------- on=True path: logits + 4096-way decoder ----------------
    def _fc_and_decoder(self, feats):
        b, f = feats.shape
        c = self.num_classes
        tb = self.batch_tile if b % self.batch_tile == 0 else b
        tj = self.dec_tile
        return pl.pallas_call(
            _dual_head_kernel,
            out_shape=(jax.ShapeDtypeStruct((b, c), self.dtype),
                       jax.ShapeDtypeStruct((b, DEC_OUT), self.dtype)),
            grid=(b // tb, DEC_OUT // tj),
            in_specs=[
                pl.BlockSpec((tb, f), lambda i, j: (i, 0)),
                pl.BlockSpec((f, c), lambda i, j: (0, 0)),
                pl.BlockSpec((1, c), lambda i, j: (0, 0)),
                pl.BlockSpec((DEC_HIDDEN, f, tj), lambda i, j: (0, 0, j)),
                pl.BlockSpec((DEC_HIDDEN, tj), lambda i, j: (0, j)),
                pl.BlockSpec((DEC_HIDDEN, tj), lambda i, j: (0, j)),
                pl.BlockSpec((1, tj), lambda i, j: (0, j)),
            ],
            out_specs=(pl.BlockSpec((tb, c), lambda i, j: (i, 0)),
                       pl.BlockSpec((tb, tj), lambda i, j: (i, j))),
            compiler_params=pltpu.CompilerParams(
                dimension_semantics=("parallel", "arbitrary")),
        )(feats, self.wfc, self.bfc, self.w1, self.b1, self.w2, self.b2)

    def __call__(self, x, on=False):
        feats = self.backbone(x)                 # x = self.model(x)
        if on:
            x1, x2 = self._fc_and_decoder(feats)
            return (x1, x2)
        return self._fc(feats)


def _reference(model, feats):
    hp = jax.lax.Precision.HIGHEST
    logits = jnp.dot(feats, model.wfc, precision=hp) + model.bfc
    h = jnp.einsum("bf,kfj->bkj", feats, model.w1, precision=hp) + model.b1[None]
    h = jnp.where(h >= 0.0, h, LEAKY_SLOPE * h)
    dec = jnp.einsum("bkj,kj->bj", h, model.w2, precision=hp) + model.b2
    return logits, dec


if __name__ == "__main__":
    key = jax.random.PRNGKey(0)
    k_bb, k_mod, k_x = jax.random.split(key, 3)

    # Small demo shapes: x is a (B, C, H, W) image batch into the backbone.
    B, C_IN, H, W = 2, 4, 16, 16
    IN_FEATURES = 32
    NUM_CLASSES = 128

    # Stand-in backbone (the real one is an externally supplied timm model).
    w_backbone = jax.random.normal(k_bb, (C_IN, IN_FEATURES), jnp.float32) * 0.1

    def backbone(imgs):
        feats = jnp.mean(imgs, axis=(2, 3))          # global average pool
        return jnp.dot(feats, w_backbone)            # (B, IN_FEATURES)

    model = DualModel3Pallas(backbone, IN_FEATURES, NUM_CLASSES, k_mod)

    x = jax.random.normal(k_x, (B, C_IN, H, W), jnp.float32)

    # on=False path: logits only
    x1_only = model(x, on=False)
    # on=True path: (logits, decoder output)
    x1, x2 = model(x, on=True)
    jax.block_until_ready((x1_only, x1, x2))

    # verify against a pure-JAX reference
    feats = backbone(x)
    ref_logits, ref_dec = _reference(model, feats)
    assert x1_only.shape == (B, NUM_CLASSES)
    assert x1.shape == (B, NUM_CLASSES)
    assert x2.shape == (B, DEC_OUT)
    assert jnp.allclose(x1_only, ref_logits, rtol=5e-3, atol=5e-3)
    assert jnp.allclose(x1, ref_logits, rtol=5e-3, atol=5e-3)
    assert jnp.allclose(x2, ref_dec, rtol=5e-3, atol=5e-3)

    print("KERNEL_OK")
</pallas_src>

<mosaic_0001>
module attributes {stable_mosaic.version = 11 : i64} {
  func.func @_fc_kernel(%arg0: i32, %arg1: memref<2x32xf32, #tpu.memory_space<vmem>>, %arg2: memref<32x128xf32, #tpu.memory_space<vmem>>, %arg3: memref<1x128xf32, #tpu.memory_space<vmem>>, %arg4: memref<2x128xf32, #tpu.memory_space<vmem>>) attributes {dimension_semantics = [#tpu.dimension_semantics<parallel>], iteration_bounds = array<i64: 1>, scalar_prefetch = 0 : i64, scratch_operands = 0 : i64, tpu.core_type = #tpu.core_type<tc>, window_params = [{transform_indices = @transform_0, window_bounds = array<i64: 2, 32>}, {pipeline_mode = #tpu.pipeline_mode<synchronous>, transform_indices = @transform_1, window_bounds = array<i64: 32, 128>}, {pipeline_mode = #tpu.pipeline_mode<synchronous>, transform_indices = @transform_2, window_bounds = array<i64: 1, 128>}, {transform_indices = @transform_3, window_bounds = array<i64: 2, 128>}]} {
    %c0 = arith.constant 0 : index
    %c0_0 = arith.constant 0 : index
    %0 = vector.load %arg1[%c0, %c0_0] : memref<2x32xf32, #tpu.memory_space<vmem>>, vector<2x32xf32>
    %c0_1 = arith.constant 0 : index
    %c0_2 = arith.constant 0 : index
    %1 = vector.load %arg2[%c0_1, %c0_2] : memref<32x128xf32, #tpu.memory_space<vmem>>, vector<32x128xf32>
    %cst = arith.constant dense<0.000000e+00> : vector<2x128xf32>
    %2 = tpu.matmul %0, %1, %cst {dimension_numbers = #tpu.dot_dimension_numbers<[1], [0], [0], [1], [0, 0, 1, 1], [], []>} : vector<2x32xf32>, vector<32x128xf32>, vector<2x128xf32> -> vector<2x128xf32>
    %c0_3 = arith.constant 0 : index
    %c0_4 = arith.constant 0 : index
    %3 = vector.load %arg3[%c0_3, %c0_4] : memref<1x128xf32, #tpu.memory_space<vmem>>, vector<1x128xf32>
    %4 = vector.broadcast %3 : vector<1x128xf32> to vector<2x128xf32>
    %5 = arith.addf %2, %4 : vector<2x128xf32>
    %c0_5 = arith.constant 0 : index
    %c0_6 = arith.constant 0 : index
    %6 = vector.load %arg4[%c0_5, %c0_6] : memref<2x128xf32, #tpu.memory_space<vmem>>, vector<2x128xf32>
    tpu.vector_store %arg4[%c0_5, %c0_6], %5 {strides = array<i32>} : memref<2x128xf32, #tpu.memory_space<vmem>>, vector<2x128xf32>,
    return
  }
  func.func @transform_0(%arg0: i32) -> (i32, i32) {
    %c0_i32 = arith.constant 0 : i32
    %c0_i32_0 = arith.constant 0 : i32
    return %arg0, %c0_i32 : i32, i32
  }
  func.func @transform_1(%arg0: i32) -> (i32, i32) {
    %c0_i32 = arith.constant 0 : i32
    %c0_i32_0 = arith.constant 0 : i32
    %c0_i32_1 = arith.constant 0 : i32
    return %c0_i32, %c0_i32_0 : i32, i32
  }
  func.func @transform_2(%arg0: i32) -> (i32, i32) {
    %c0_i32 = arith.constant 0 : i32
    %c0_i32_0 = arith.constant 0 : i32
    %c0_i32_1 = arith.constant 0 : i32
    return %c0_i32, %c0_i32_0 : i32, i32
  }
  func.func @transform_3(%arg0: i32) -> (i32, i32) {
    %c0_i32 = arith.constant 0 : i32
    %c0_i32_0 = arith.constant 0 : i32
    return %arg0, %c0_i32 : i32, i32
  }
}

</mosaic_0001>

<llo_original>
// kernel: tpu_custom_call.1
$region0: #{tpu_custom_call.1}
  #allocation0 [shape = 'u32[]', space=smem, size = 0x4, offset = 0x4, fixed_abs, tag = 'smem constant byte address 0x4 - core index']
  #allocation1 [shape = 'u32[72,128]{1,0:T(1,128)}', space=vmem, size = 0x9000, scoped, tag = 'internal scratch']
  %s0 = inlined_call_operand.hbm [shape: f32[2,32], index: 0, kind: input, shape index: {}]
  %s1 = inlined_call_operand.hbm [shape: f32[32,128], index: 1, kind: input, shape index: {}]
  %s2 = inlined_call_operand.vmem [shape: f32[1,128], index: 2, kind: input, shape index: {}]
  %s3 = inlined_call_operand.hbm [shape: f32[2,128], index: 3, kind: output, shape index: {}]
  %s4 = sld [smem:[#allocation0]]
  $region30: #{tpu_custom_call.1} parent=0
    _
  %s6 = ssub.s32 1, %s4
  %s7 = scalar_select 0, %s6, %s4
  $region1: #{tpu_custom_call.1} parent=0
    #allocation2 [shape = 'u8[1024]{0}', space=vmem, size = 0x400, scoped, tag = 'input window, operand 0, single buffered']
    #allocation3 [shape = 's32[1]{0}', space=sflag, size = 0x4, scoped, tag = 'scoped memory for tpu_custom_call.1']
    #allocation4 [shape = 's32[1]{0}', space=sflag, size = 0x4, scoped, tag = 'scoped memory for tpu_custom_call.1']
    #allocation5 [shape = 'u8[16384]{0}', space=vmem, size = 0x4000, scoped, tag = 'input window, operand 1, single buffered']
    #allocation6 [shape = 's32[1]{0}', space=sflag, size = 0x4, scoped, tag = 'scoped memory for tpu_custom_call.1']
    #allocation7 [shape = 'u8[1024]{0}', space=vmem, size = 0x400, scoped, tag = 'output window, operand 0, single buffered']
    %8 = vsyncpa [#allocation3], 0
    %9 = vsyncpa [#allocation6], 0
    %10 = vsyncpa [#allocation4], 0
    // Predicated region
    $region2: #{tpu_custom_call.1} parent=1 // pred_check
      _
    $region3: #{tpu_custom_call.1} parent=1 // pred_check_branch
      %12 = sbr.rel (0) target = $region5
    $region4: #{tpu_custom_call.1} parent=1 // pred_region
      %14 = vsyncadd [#allocation3], 0
      %s16 = sshll.u32 %s0, 4
      %s17 = int_to_ptr.hbm [resolvable:$true] %s16
      %s18 = sshll.u32 [#allocation2], 4
      %s19 = int_to_ptr.vmem [resolvable:$true] %s18
      %21 = dma.hbm_to_vmem [thread:$0]  %s17, 32, %s19, [#allocation3]
    $region5: #{tpu_custom_call.1} parent=1 // pred_fallthru
      _
    // Predicated region
    $region6: #{tpu_custom_call.1} parent=1 // pred_check
      _
    $region7: #{tpu_custom_call.1} parent=1 // pred_check_branch
      %23 = sbr.rel (0) target = $region9
    $region8: #{tpu_custom_call.1} parent=1 // pred_region
      %25 = vsyncadd [#allocation6], 0
      %s26 = sshll.u32 %s1, 4
      %s27 = int_to_ptr.hbm [resolvable:$true] %s26
      %s28 = sshll.u32 [#allocation5], 4
      %s29 = int_to_ptr.vmem [resolvable:$true] %s28
      %34 = dma.hbm_to_vmem [thread:$0]  %s27, 512, %s29, [#allocation6], 128, 128, 8
    $region9: #{tpu_custom_call.1} parent=1 // pred_fallthru
      _
    // Predicated region
    $region10: #{tpu_custom_call.1} parent=1 // pred_check
      _
    $region11: #{tpu_custom_call.1} parent=1 // pred_check_branch
      %36 = sbr.rel (0) target = $region13
    $region12: #{tpu_custom_call.1} parent=1 // pred_region
      _
    $region13: #{tpu_custom_call.1} parent=1 // pred_fallthru
      _
    // Predicated region
    $region14: #{tpu_custom_call.1} parent=1 // pred_check
      _
    $region15: #{tpu_custom_call.1} parent=1 // pred_check_branch
      %38 = sbr.rel (0) target = $region17
    $region16: #{tpu_custom_call.1} parent=1 // pred_region
      %40 = dma.done [#allocation3], 32
    $region17: #{tpu_custom_call.1} parent=1 // pred_fallthru
      _
    // Predicated region
    $region18: #{tpu_custom_call.1} parent=1 // pred_check
      _
    $region19: #{tpu_custom_call.1} parent=1 // pred_check_branch
      %42 = sbr.rel (0) target = $region21
    $region20: #{tpu_custom_call.1} parent=1 // pred_region
      %44 = dma.done [#allocation6], 512
    $region21: #{tpu_custom_call.1} parent=1 // pred_fallthru
      _
    %v45 = vld [vmem:[#allocation2] sm:$0x3]
    %v46 = vld [vmem:[#allocation5] sm:$0xff]
    %v47 = vld [vmem:[#allocation5 + $0x8] sm:$0xff]
    %v48 = vld [vmem:[#allocation5 + $0x10] sm:$0xff]
    %v49 = vld [vmem:[#allocation5 + $0x18] sm:$0xff]
    %v50 = vld [vmem:[%s2] sm:$0x1]
    %v52 = vperm.slane %v50, 0
    %vm54 = vcmask 261120
    %v56 = vsel %vm54, %v45, 0
    %58 = vmatpush.msra.mxu0 0.0
    %59 = vmatpush.msra.mxu0 0.0
    %60 = vmatpush.msra.mxu0 0.0
    %61 = vmatpush.msra.mxu0 0.0
    %62 = vmatpush.msra.mxu0 0.0
    %63 = vmatpush.msra.mxu0 0.0
    %64 = vmatpush.msra.mxu0 0.0
    %65 = vmatpush.msra.mxu0 0.0
    %66 = vmatpush.msra.mxu0 0.0
    %67 = vmatpush.msra.mxu0 0.0
    %68 = vmatpush.msra.mxu0 0.0
    %69 = vmatpush.msra.mxu0 0.0
    %70 = vmatpush.msra.mxu0 %v49
    %71 = vmatpush.msra.mxu0 %v48
    %72 = vmatpush.msra.mxu0 %v47
    %73 = vmatpush.msra.mxu0 %v46
    %74 = vmatmul.f32.gmra.mxu0 %v56
    %v75 = vpop.f32.mrf.mxu0
    %v76 = vadd.f32 %v52, %v75
    %77 = vdwg.mxu0
    %78 = vst [vmem:[#allocation7] sm:$0x3] %v76
    // Predicated region
    $region22: #{tpu_custom_call.1} parent=1 // pred_check
      _
    $region23: #{tpu_custom_call.1} parent=1 // pred_check_branch
      %80 = sbr.rel (0) target = $region25
    $region24: #{tpu_custom_call.1} parent=1 // pred_region
      %82 = vsyncadd [#allocation4], 0
      %s84 = sshll.u32 [#allocation7], 4
      %s85 = int_to_ptr.vmem [resolvable:$true] %s84
      %s86 = sshll.u32 %s3, 4
      %s87 = int_to_ptr.hbm [resolvable:$true] %s86
      %89 = dma.vmem_to_hbm [thread:$0]  %s85, 32, %s87, [#allocation4]
    $region25: #{tpu_custom_call.1} parent=1 // pred_fallthru
      _
    // Predicated region
    $region26: #{tpu_custom_call.1} parent=1 // pred_check
      _
    $region27: #{tpu_custom_call.1} parent=1 // pred_check_branch
      %91 = sbr.rel (0) target = $region29
    $region28: #{tpu_custom_call.1} parent=1 // pred_region
      %93 = dma.done [#allocation4], 32
    $region29: #{tpu_custom_call.1} parent=1 // pred_fallthru
      _
    %94 = vsyncpa [#allocation3], 1
    %95 = vsyncpa [#allocation6], 1
    %96 = vsyncpa [#allocation4], 1

</llo_original>
